<compile_context>
chip_gen: v5e
topology: v5e:2x2
jax: 0.10.0
libtpu: 0.0.40
codegen_flags: <defaults>
</compile_context>

<pallas_src>
import functools

import jax
import jax.numpy as jnp
from jax.experimental import pallas as pl
from jax.experimental.pallas import tpu as pltpu

EPS = 1e-5  # nn.LayerNorm default


def _round_up(x: int, m: int) -> int:
    return ((x + m - 1) // m) * m


def _head_kernel(x_ref, gamma_ref, beta_ref, w_ref, b_ref, o_ref, acc_ref,
                 *, inv_s: float, seq_rem: int):
    # x_ref:     (TB, TS, E)   activation tile for this (batch, seq) grid step
    # gamma/beta:(1, E)        LayerNorm affine params (resident, single-buffered)
    # w_ref:     (E, Cp)       linear weight, classes padded to 128 (resident)
    # b_ref:     (1, Cp)       linear bias (resident)
    # o_ref:     (TB, Cp)      output tile, written only on the last seq step
    # acc_ref:   (TB, E) f32   running per-row sum over the sequence axis
    si = pl.program_id(1)
    last = pl.num_programs(1) - 1

    @pl.when(si == 0)
    def _():
        acc_ref[...] = jnp.zeros_like(acc_ref)

    def _accumulate(tile):
        # f32 accumulation without a standalone full-tile upcast temp.
        acc_ref[...] += jnp.sum(tile, axis=1, dtype=jnp.float32)

    if seq_rem == 0:
        # S % TS == 0: every tile is fully valid, no masking anywhere.
        _accumulate(x_ref[...])
    else:
        # x is unpadded, so the final seq tile holds garbage rows past S.
        # Mask with a select (not a multiply) so Inf/NaN garbage cannot leak.
        @pl.when(si != last)
        def _():
            _accumulate(x_ref[...])

        @pl.when(si == last)
        def _():
            xt = x_ref[...]
            ts, e = xt.shape[1], xt.shape[2]
            row_ids = jax.lax.broadcasted_iota(jnp.int32, (ts, e), 0)
            valid = row_ids < seq_rem
            _accumulate(jnp.where(valid[None], xt, jnp.zeros_like(xt)))

    @pl.when(si == last)
    def _():
        pooled = acc_ref[...] * inv_s                                  # mean over seq
        mu = jnp.mean(pooled, axis=-1, keepdims=True)                  # (TB, 1)
        var = jnp.mean(jnp.square(pooled - mu), axis=-1, keepdims=True)
        xn = (pooled - mu) * jax.lax.rsqrt(var + EPS)                  # (TB, E) f32
        y = xn * gamma_ref[...].astype(jnp.float32) + beta_ref[...].astype(jnp.float32)
        # MXU matmul in the weights' native dtype (bf16 stays bf16), f32 accum.
        out = jnp.dot(y.astype(w_ref.dtype), w_ref[...],
                      preferred_element_type=jnp.float32)
        out = out + b_ref[...].astype(jnp.float32)
        o_ref[...] = out.astype(o_ref.dtype)


def _hw_budgets():
    """(double-buffered x-tile budget, vmem_limit cap) per TPU generation."""
    try:
        cap = int(getattr(pltpu.get_tpu_info(), "vmem_capacity_bytes", 0))
    except Exception:
        cap = 0
    if cap >= 96 * 1024 * 1024:
        # v5e / v6e: 128 MiB physical VMEM -> spend it on bigger streamed tiles.
        return 36 * 1024 * 1024, 96 * 1024 * 1024
    # v7x (64 MiB physical) or unknown: stay conservative.
    return 16 * 1024 * 1024, 40 * 1024 * 1024


def _halve_tile(tb: int) -> int:
    return max(8, _round_up(tb // 2, 8))


def _pick_tiles(B: int, S: int, E: int, itemsize: int, x_budget: int):
    TB = min(128, _round_up(B, 8))
    # v7x has 2 TensorCores: make sure the parallel batch axis has >=2 steps
    # whenever the batch is large enough to split.
    while TB > 8 and pl.cdiv(B, TB) < 2:
        TB = _halve_tile(TB)
    # If even TS=8 would overshoot the x budget (very wide E), shrink TB first
    # instead of silently blowing the VMEM limit.
    while TB > 8 and 2 * TB * 8 * E * itemsize > x_budget:
        TB = _halve_tile(TB)
    max_ts = max(8, (x_budget // (2 * TB * E * itemsize)) // 8 * 8)
    TS = min(_round_up(S, 8), max_ts)
    # Prefer a TS that exactly divides S (no tail-tile mask), if one is close.
    if TS < S:
        best = 0
        d = 8
        while d <= TS:
            if S % d == 0:
                best = d
            d += 8
        if best >= max(8, TS // 2):
            TS = best
    return TB, max(8, (TS // 8) * 8)


def classification_head(x, gamma, beta, w, b):
    """x: (B, S, E); gamma/beta: (E,); w: (E, C); b: (C,) -> (B, C)."""
    B, S, E = x.shape
    C = w.shape[1]
    x_itemsize = jnp.dtype(x.dtype).itemsize
    w_itemsize = jnp.dtype(w.dtype).itemsize

    x_budget, vmem_cap = _hw_budgets()
    TB, TS = _pick_tiles(B, S, E, x_itemsize, x_budget)

    nb = pl.cdiv(B, TB)
    ns = pl.cdiv(S, TS)
    seq_rem = S % TS
    Cp = _round_up(C, 128)  # lane-dense output / weight columns

    # Only the tiny (E, C) weight / (C,) bias get class-dim padding; x itself is
    # streamed unpadded -- no extra HBM pass over the activations.
    w_p = jnp.pad(w, ((0, 0), (0, Cp - C)))
    b_p = jnp.pad(b.reshape(1, C), ((0, 0), (0, Cp - C)))
    gamma2 = gamma.reshape(1, E)
    beta2 = beta.reshape(1, E)

    # Real VMEM footprint + headroom, capped per generation.
    footprint = (2 * TB * TS * E * x_itemsize      # double-buffered x tile
                 + E * Cp * w_itemsize             # single-buffered weight
                 + (2 * E + Cp) * 4                # gamma / beta / bias
                 + TB * E * 4                      # f32 accumulator scratch
                 + 2 * TB * Cp * x_itemsize)       # double-buffered output tile
    vmem_limit = int(min(vmem_cap,
                         max(32 * 1024 * 1024, footprint + 8 * 1024 * 1024)))

    kernel = functools.partial(_head_kernel, inv_s=1.0 / S, seq_rem=seq_rem)

    cost = pl.CostEstimate(
        flops=int(2 * B * S * E + 10 * B * E + 2 * B * E * Cp),
        transcendentals=int(B),
        bytes_accessed=int(B * S * E * x_itemsize + E * Cp * w_itemsize
                           + nb * TB * Cp * x_itemsize),
    )

    resident = dict(pipeline_mode=pl.Buffered(1))  # constant-index operands
    out = pl.pallas_call(
        kernel,
        out_shape=jax.ShapeDtypeStruct((nb * TB, Cp), x.dtype),
        grid_spec=pltpu.PrefetchScalarGridSpec(
            num_scalar_prefetch=0,
            grid=(nb, ns),
            in_specs=[
                pl.BlockSpec((TB, TS, E), lambda bi, si: (bi, si, 0)),     # x tile
                pl.BlockSpec((1, E), lambda bi, si: (0, 0), **resident),   # gamma
                pl.BlockSpec((1, E), lambda bi, si: (0, 0), **resident),   # beta
                pl.BlockSpec((E, Cp), lambda bi, si: (0, 0), **resident),  # W
                pl.BlockSpec((1, Cp), lambda bi, si: (0, 0), **resident),  # bias
            ],
            out_specs=pl.BlockSpec((TB, Cp), lambda bi, si: (bi, 0)),
            scratch_shapes=[pltpu.VMEM((TB, E), jnp.float32)],
        ),
        compiler_params=pltpu.CompilerParams(
            dimension_semantics=("parallel", "arbitrary"),
            vmem_limit_bytes=vmem_limit,
        ),
        cost_estimate=cost,
    )(x, gamma2, beta2, w_p, b_p)

    return out[:B, :C]


def reference(x, gamma, beta, w, b):
    pooled = jnp.mean(x, axis=-2)
    mu = jnp.mean(pooled, axis=-1, keepdims=True)
    var = jnp.mean((pooled - mu) ** 2, axis=-1, keepdims=True)
    xn = (pooled - mu) / jnp.sqrt(var + EPS)
    y = xn * gamma + beta
    return y @ w + b


if __name__ == "__main__":
    # Small shapes consistent with the module: (batch, seq, embed) -> classes.
    B, S, E, C = 2, 8, 32, 10
    key = jax.random.PRNGKey(0)
    kx, kx2, kg, kbeta, kw, kb = jax.random.split(key, 6)

    x = jax.random.normal(kx, (B, S, E), dtype=jnp.float32)
    gamma = 1.0 + 0.1 * jax.random.normal(kg, (E,), dtype=jnp.float32)   # LN weight
    beta = 0.05 * jax.random.normal(kbeta, (E,), dtype=jnp.float32)      # LN bias
    w = jax.random.normal(kw, (E, C), dtype=jnp.float32) * (1.0 / jnp.sqrt(E))
    b = jax.random.normal(kb, (C,), dtype=jnp.float32) * 0.01

    out = jax.block_until_ready(classification_head(x, gamma, beta, w, b))
    ref = reference(x, gamma, beta, w, b)
    assert out.shape == (B, C), out.shape
    assert jnp.allclose(out, ref, atol=2e-4, rtol=2e-4), "mismatch vs reference"

    # Ragged shapes (batch and seq not tile multiples) exercise the no-pad path:
    # unpadded x stream + in-kernel tail-tile mask.
    B2, S2 = 3, 25
    x2 = jax.random.normal(kx2, (B2, S2, E), dtype=jnp.float32)
    out2 = jax.block_until_ready(classification_head(x2, gamma, beta, w, b))
    ref2 = reference(x2, gamma, beta, w, b)
    assert out2.shape == (B2, C), out2.shape
    assert jnp.allclose(out2, ref2, atol=2e-4, rtol=2e-4), "ragged mismatch vs reference"

    print("KERNEL_OK")
</pallas_src>

<mosaic_0001>
module attributes {stable_mosaic.version = 11 : i64} {
  func.func @_head_kernel(%arg0: i32, %arg1: i32, %arg2: memref<8x8x32xf32, #tpu.memory_space<vmem>>, %arg3: memref<1x32xf32, #tpu.memory_space<vmem>>, %arg4: memref<1x32xf32, #tpu.memory_space<vmem>>, %arg5: memref<32x128xf32, #tpu.memory_space<vmem>>, %arg6: memref<1x128xf32, #tpu.memory_space<vmem>>, %arg7: memref<8x128xf32, #tpu.memory_space<vmem>>, %arg8: memref<8x32xf32, #tpu.memory_space<vmem>>) attributes {dimension_semantics = [#tpu.dimension_semantics<parallel>, #tpu.dimension_semantics<arbitrary>], iteration_bounds = array<i64: 1, 1>, scalar_prefetch = 0 : i64, scratch_operands = 1 : i64, tpu.core_type = #tpu.core_type<tc>, window_params = [{transform_indices = @transform_0, window_bounds = array<i64: 8, 8, 32>}, {pipeline_mode = #tpu.pipeline_mode<synchronous>, transform_indices = @transform_1, window_bounds = array<i64: 1, 32>}, {pipeline_mode = #tpu.pipeline_mode<synchronous>, transform_indices = @transform_2, window_bounds = array<i64: 1, 32>}, {pipeline_mode = #tpu.pipeline_mode<synchronous>, transform_indices = @transform_3, window_bounds = array<i64: 32, 128>}, {pipeline_mode = #tpu.pipeline_mode<synchronous>, transform_indices = @transform_4, window_bounds = array<i64: 1, 128>}, {transform_indices = @transform_5, window_bounds = array<i64: 8, 128>}]} {
    %c0_i32 = arith.constant 0 : i32
    %0 = arith.cmpi eq, %arg1, %c0_i32 : i32
    %1 = arith.extui %0 : i1 to i32
    %c0_i32_0 = arith.constant 0 : i32
    %2 = arith.cmpi ne, %1, %c0_i32_0 : i32
    scf.if %2 {
      %cst_9 = arith.constant 0.000000e+00 : f32
      %11 = vector.broadcast %cst_9 : f32 to vector<8x32xf32>
      %c0_10 = arith.constant 0 : index
      %c0_11 = arith.constant 0 : index
      %12 = vector.load %arg8[%c0_10, %c0_11] : memref<8x32xf32, #tpu.memory_space<vmem>>, vector<8x32xf32>
      tpu.vector_store %arg8[%c0_10, %c0_11], %11 {strides = array<i32>} : memref<8x32xf32, #tpu.memory_space<vmem>>, vector<8x32xf32>,
    } else {
    }
    %c0 = arith.constant 0 : index
    %c0_1 = arith.constant 0 : index
    %c0_2 = arith.constant 0 : index
    %3 = vector.load %arg2[%c0, %c0_1, %c0_2] : memref<8x8x32xf32, #tpu.memory_space<vmem>>, vector<8x8x32xf32>
    %c0_3 = arith.constant 0 : index
    %c0_4 = arith.constant 0 : index
    %4 = vector.load %arg8[%c0_3, %c0_4] : memref<8x32xf32, #tpu.memory_space<vmem>>, vector<8x32xf32>
    %cst = arith.constant dense<0.000000e+00> : vector<8x32xf32>
    %5 = vector.multi_reduction <add>, %3, %cst [1] : vector<8x8x32xf32> to vector<8x32xf32>
    %6 = arith.addf %4, %5 : vector<8x32xf32>
    %c0_5 = arith.constant 0 : index
    %c0_6 = arith.constant 0 : index
    %7 = vector.load %arg8[%c0_5, %c0_6] : memref<8x32xf32, #tpu.memory_space<vmem>>, vector<8x32xf32>
    tpu.vector_store %arg8[%c0_5, %c0_6], %6 {strides = array<i32>} : memref<8x32xf32, #tpu.memory_space<vmem>>, vector<8x32xf32>,
    %c0_i32_7 = arith.constant 0 : i32
    %8 = arith.cmpi eq, %arg1, %c0_i32_7 : i32
    %9 = arith.extui %8 : i1 to i32
    %c0_i32_8 = arith.constant 0 : i32
    %10 = arith.cmpi ne, %9, %c0_i32_8 : i32
    scf.if %10 {
      %c0_9 = arith.constant 0 : index
      %c0_10 = arith.constant 0 : index
      %11 = vector.load %arg8[%c0_9, %c0_10] : memref<8x32xf32, #tpu.memory_space<vmem>>, vector<8x32xf32>
      %cst_11 = arith.constant 1.250000e-01 : f32
      %12 = vector.broadcast %cst_11 : f32 to vector<8x32xf32>
      %13 = arith.mulf %11, %12 : vector<8x32xf32>
      %cst_12 = arith.constant dense<0.000000e+00> : vector<8xf32>
      %14 = vector.multi_reduction <add>, %13, %cst_12 [1] : vector<8x32xf32> to vector<8xf32>
      %15 = vector.shape_cast %14 : vector<8xf32> to vector<8x1xf32>
      %cst_13 = arith.constant 3.200000e+01 : f32
      %16 = vector.broadcast %cst_13 : f32 to vector<8x1xf32>
      %17 = arith.divf %15, %16 : vector<8x1xf32>
      %18 = vector.broadcast %17 : vector<8x1xf32> to vector<8x32xf32>
      %19 = arith.subf %13, %18 : vector<8x32xf32>
      %20 = arith.mulf %19, %19 : vector<8x32xf32>
      %cst_14 = arith.constant dense<0.000000e+00> : vector<8xf32>
      %21 = vector.multi_reduction <add>, %20, %cst_14 [1] : vector<8x32xf32> to vector<8xf32>
      %22 = vector.shape_cast %21 : vector<8xf32> to vector<8x1xf32>
      %cst_15 = arith.constant 3.200000e+01 : f32
      %23 = vector.broadcast %cst_15 : f32 to vector<8x1xf32>
      %24 = arith.divf %22, %23 : vector<8x1xf32>
      %25 = vector.broadcast %17 : vector<8x1xf32> to vector<8x32xf32>
      %26 = arith.subf %13, %25 : vector<8x32xf32>
      %cst_16 = arith.constant 9.99999974E-6 : f32
      %27 = vector.broadcast %cst_16 : f32 to vector<8x1xf32>
      %28 = arith.addf %24, %27 : vector<8x1xf32>
      %29 = math.rsqrt %28 : vector<8x1xf32>
      %30 = vector.broadcast %29 : vector<8x1xf32> to vector<8x32xf32>
      %31 = arith.mulf %26, %30 : vector<8x32xf32>
      %c0_17 = arith.constant 0 : index
      %c0_18 = arith.constant 0 : index
      %32 = vector.load %arg3[%c0_17, %c0_18] : memref<1x32xf32, #tpu.memory_space<vmem>>, vector<1x32xf32>
      %33 = vector.broadcast %32 : vector<1x32xf32> to vector<8x32xf32>
      %34 = arith.mulf %31, %33 : vector<8x32xf32>
      %c0_19 = arith.constant 0 : index
      %c0_20 = arith.constant 0 : index
      %35 = vector.load %arg4[%c0_19, %c0_20] : memref<1x32xf32, #tpu.memory_space<vmem>>, vector<1x32xf32>
      %36 = vector.broadcast %35 : vector<1x32xf32> to vector<8x32xf32>
      %37 = arith.addf %34, %36 : vector<8x32xf32>
      %c0_21 = arith.constant 0 : index
      %c0_22 = arith.constant 0 : index
      %38 = vector.load %arg5[%c0_21, %c0_22] : memref<32x128xf32, #tpu.memory_space<vmem>>, vector<32x128xf32>
      %cst_23 = arith.constant dense<0.000000e+00> : vector<8x128xf32>
      %39 = tpu.matmul %37, %38, %cst_23 {dimension_numbers = #tpu.dot_dimension_numbers<[1], [0], [0], [1], [0, 0, 1, 1], [], []>} : vector<8x32xf32>, vector<32x128xf32>, vector<8x128xf32> -> vector<8x128xf32>
      %c0_24 = arith.constant 0 : index
      %c0_25 = arith.constant 0 : index
      %40 = vector.load %arg6[%c0_24, %c0_25] : memref<1x128xf32, #tpu.memory_space<vmem>>, vector<1x128xf32>
      %41 = vector.broadcast %40 : vector<1x128xf32> to vector<8x128xf32>
      %42 = arith.addf %39, %41 : vector<8x128xf32>
      %c0_26 = arith.constant 0 : index
      %c0_27 = arith.constant 0 : index
      %43 = vector.load %arg7[%c0_26, %c0_27] : memref<8x128xf32, #tpu.memory_space<vmem>>, vector<8x128xf32>
      tpu.vector_store %arg7[%c0_26, %c0_27], %42 {strides = array<i32>} : memref<8x128xf32, #tpu.memory_space<vmem>>, vector<8x128xf32>,
    } else {
    }
    return
  }
  func.func @transform_0(%arg0: i32, %arg1: i32) -> (i32, i32, i32) {
    %c0_i32 = arith.constant 0 : i32
    %c0_i32_0 = arith.constant 0 : i32
    return %arg0, %arg1, %c0_i32 : i32, i32, i32
  }
  func.func @transform_1(%arg0: i32, %arg1: i32) -> (i32, i32) {
    %c0_i32 = arith.constant 0 : i32
    %c0_i32_0 = arith.constant 0 : i32
    %c0_i32_1 = arith.constant 0 : i32
    return %c0_i32, %c0_i32_0 : i32, i32
  }
  func.func @transform_2(%arg0: i32, %arg1: i32) -> (i32, i32) {
    %c0_i32 = arith.constant 0 : i32
    %c0_i32_0 = arith.constant 0 : i32
    %c0_i32_1 = arith.constant 0 : i32
    return %c0_i32, %c0_i32_0 : i32, i32
  }
  func.func @transform_3(%arg0: i32, %arg1: i32) -> (i32, i32) {
    %c0_i32 = arith.constant 0 : i32
    %c0_i32_0 = arith.constant 0 : i32
    %c0_i32_1 = arith.constant 0 : i32
    return %c0_i32, %c0_i32_0 : i32, i32
  }
  func.func @transform_4(%arg0: i32, %arg1: i32) -> (i32, i32) {
    %c0_i32 = arith.constant 0 : i32
    %c0_i32_0 = arith.constant 0 : i32
    %c0_i32_1 = arith.constant 0 : i32
    return %c0_i32, %c0_i32_0 : i32, i32
  }
  func.func @transform_5(%arg0: i32, %arg1: i32) -> (i32, i32) {
    %c0_i32 = arith.constant 0 : i32
    %c0_i32_0 = arith.constant 0 : i32
    return %arg0, %c0_i32 : i32, i32
  }
}

</mosaic_0001>

<llo_original>
// kernel: tpu_custom_call.1
$region0: #{tpu_custom_call.1}
  #allocation0 [shape = 'u32[]', space=smem, size = 0x4, offset = 0x4, fixed_abs, tag = 'smem constant byte address 0x4 - core index']
  #allocation1 [shape = 'u32[72,128]{1,0:T(1,128)}', space=vmem, size = 0x9000, scoped, tag = 'internal scratch']
  #allocation2 [shape = 'f32[8,32]{1,0:T(8,128)}', space=vmem, size = 0x1000, scoped, tag = 'scratch operand']
  %s0 = inlined_call_operand.hbm [shape: f32[2,8,32], index: 0, kind: input, shape index: {}]
  %s1 = inlined_call_operand.hbm [shape: f32[1,32], index: 1, kind: input, shape index: {}]
  %s2 = inlined_call_operand.vmem [shape: f32[1,32], index: 2, kind: input, shape index: {}]
  %s3 = inlined_call_operand.hbm [shape: f32[32,128], index: 3, kind: input, shape index: {}]
  %s4 = inlined_call_operand.vmem [shape: f32[1,128], index: 4, kind: input, shape index: {}]
  %s5 = inlined_call_operand.hbm [shape: f32[8,128], index: 5, kind: output, shape index: {}]
  %s6 = sld [smem:[#allocation0]]
  $region50: #{tpu_custom_call.1} parent=0
    _
  %s8 = ssub.s32 1, %s6
  %s9 = scalar_select 0, %s8, %s6
  $region1: #{tpu_custom_call.1} parent=0
    #allocation3 [shape = 'u8[32768]{0}', space=vmem, size = 0x8000, scoped, tag = 'input window, operand 0, single buffered']
    #allocation4 [shape = 's32[1]{0}', space=sflag, size = 0x4, scoped, tag = 'scoped memory for tpu_custom_call.1']
    #allocation5 [shape = 's32[1]{0}', space=sflag, size = 0x4, scoped, tag = 'scoped memory for tpu_custom_call.1']
    #allocation6 [shape = 'u8[512]{0}', space=vmem, size = 0x400, scoped, tag = 'input window, operand 1, single buffered']
    #allocation7 [shape = 's32[1]{0}', space=sflag, size = 0x4, scoped, tag = 'scoped memory for tpu_custom_call.1']
    #allocation8 [shape = 'u8[16384]{0}', space=vmem, size = 0x4000, scoped, tag = 'input window, operand 3, single buffered']
    #allocation9 [shape = 'u8[4096]{0}', space=vmem, size = 0x1000, scoped, tag = 'output window, operand 0, single buffered']
    %10 = vsyncpa [#allocation4], 0
    %11 = vsyncpa [#allocation7], 0
    %12 = vsyncpa [#allocation5], 0
    // Predicated region
    $region2: #{tpu_custom_call.1} parent=1 // pred_check
      _
    $region3: #{tpu_custom_call.1} parent=1 // pred_check_branch
      %14 = sbr.rel (0) target = $region5
    $region4: #{tpu_custom_call.1} parent=1 // pred_region
      %16 = vsyncadd [#allocation4], 768
      %s17 = sshll.u32 %s0, 4
      %s18 = int_to_ptr.hbm [resolvable:$true] %s17
      %s19 = sshll.u32 [#allocation3], 4
      %s20 = int_to_ptr.vmem [resolvable:$true] %s19
      %25 = dma.hbm_to_vmem [thread:$0]  %s18, 256, %s20, [#allocation4], 128, 128, 8
    $region5: #{tpu_custom_call.1} parent=1 // pred_fallthru
      _
    // Predicated region
    $region6: #{tpu_custom_call.1} parent=1 // pred_check
      _
    $region7: #{tpu_custom_call.1} parent=1 // pred_check_branch
      %27 = sbr.rel (0) target = $region9
    $region8: #{tpu_custom_call.1} parent=1 // pred_region
      %29 = vsyncadd [#allocation7], 0
      %s31 = sshll.u32 %s1, 4
      %s32 = int_to_ptr.hbm [resolvable:$true] %s31
      %s33 = sshll.u32 [#allocation6], 4
      %s34 = int_to_ptr.vmem [resolvable:$true] %s33
      %36 = dma.hbm_to_vmem [thread:$0]  %s32, 16, %s34, [#allocation7]
    $region9: #{tpu_custom_call.1} parent=1 // pred_fallthru
      _
    // Predicated region
    $region10: #{tpu_custom_call.1} parent=1 // pred_check
      _
    $region11: #{tpu_custom_call.1} parent=1 // pred_check_branch
      %38 = sbr.rel (0) target = $region13
    $region12: #{tpu_custom_call.1} parent=1 // pred_region
      _
    $region13: #{tpu_custom_call.1} parent=1 // pred_fallthru
      _
    // Predicated region
    $region14: #{tpu_custom_call.1} parent=1 // pred_check
      _
    $region15: #{tpu_custom_call.1} parent=1 // pred_check_branch
      %40 = sbr.rel (0) target = $region17
    $region16: #{tpu_custom_call.1} parent=1 // pred_region
      %42 = vsyncadd [#allocation7], 0
      %s43 = sshll.u32 %s3, 4
      %s44 = int_to_ptr.hbm [resolvable:$true] %s43
      %s45 = sshll.u32 [#allocation8], 4
      %s46 = int_to_ptr.vmem [resolvable:$true] %s45
      %51 = dma.hbm_to_vmem [thread:$0]  %s44, 512, %s46, [#allocation7], 128, 128, 8
    $region17: #{tpu_custom_call.1} parent=1 // pred_fallthru
      _
    // Predicated region
    $region18: #{tpu_custom_call.1} parent=1 // pred_check
      _
    $region19: #{tpu_custom_call.1} parent=1 // pred_check_branch
      %53 = sbr.rel (0) target = $region21
    $region20: #{tpu_custom_call.1} parent=1 // pred_region
      _
    $region21: #{tpu_custom_call.1} parent=1 // pred_fallthru
      _
    // Predicated region
    $region22: #{tpu_custom_call.1} parent=1 // pred_check
      _
    $region23: #{tpu_custom_call.1} parent=1 // pred_check_branch
      %55 = sbr.rel (0) target = $region25
    $region24: #{tpu_custom_call.1} parent=1 // pred_region
      %57 = dma.done [#allocation4], 1024
    $region25: #{tpu_custom_call.1} parent=1 // pred_fallthru
      _
    // Predicated region
    $region26: #{tpu_custom_call.1} parent=1 // pred_check
      _
    $region27: #{tpu_custom_call.1} parent=1 // pred_check_branch
      %59 = sbr.rel (0) target = $region29
    $region28: #{tpu_custom_call.1} parent=1 // pred_region
      %61 = dma.done [#allocation7], 16
    $region29: #{tpu_custom_call.1} parent=1 // pred_fallthru
      _
    // Predicated region
    $region30: #{tpu_custom_call.1} parent=1 // pred_check
      _
    $region31: #{tpu_custom_call.1} parent=1 // pred_check_branch
      %63 = sbr.rel (0) target = $region33
    $region32: #{tpu_custom_call.1} parent=1 // pred_region
      %65 = dma.done [#allocation7], 512
    $region33: #{tpu_custom_call.1} parent=1 // pred_fallthru
      _
    %p66 = scmp.eq.s32.totalorder 0, 0
    // Predicated region
    $region34: #{tpu_custom_call.1} parent=1 // pred_check
      %p67 = pneg %p66
    $region35: #{tpu_custom_call.1} parent=1 // pred_check_branch
      %69 = sbr.rel (%p67) target = $region37
    $region36: #{tpu_custom_call.1} parent=1 // pred_region
      %vm70 = vcmask 261120
      %71 = vst.msk [vmem:[#allocation2] sm:$0xff] %vm70, 0.0
    $region37: #{tpu_custom_call.1} parent=1 // pred_fallthru
      _
    %v72 = vld [vmem:[#allocation3] sm:$0xff]
    %v73 = vld [vmem:[#allocation3 + $0x8] sm:$0xff]
    %v74 = vld [vmem:[#allocation3 + $0x10] sm:$0xff]
    %v75 = vld [vmem:[#allocation3 + $0x18] sm:$0xff]
    %v76 = vld [vmem:[#allocation3 + $0x20] sm:$0xff]
    %v77 = vld [vmem:[#allocation3 + $0x28] sm:$0xff]
    %v78 = vld [vmem:[#allocation3 + $0x30] sm:$0xff]
    %v79 = vld [vmem:[#allocation3 + $0x38] sm:$0xff]
    %v80 = vld [vmem:[#allocation2] sm:$0xff]
    %vm81 = vcmask 261120
    %v82 = vsel %vm81, %v72, 0.0
    %v83 = vrot.slane %v82, 4
    %v84 = vadd.f32 %v82, %v83
    %v85 = vrot.slane %v84, 2
    %v86 = vadd.f32 %v84, %v85
    %v87 = vrot.slane %v86, 1
    %v88 = vadd.f32 %v86, %v87
    %v89 = vsel %vm81, %v73, 0.0
    %v90 = vrot.slane %v89, 4
    %v91 = vadd.f32 %v89, %v90
    %v92 = vrot.slane %v91, 2
    %v93 = vadd.f32 %v91, %v92
    %v94 = vrot.slane %v93, 1
    %v95 = vadd.f32 %v93, %v94
    %v96 = vsel %vm81, %v74, 0.0
    %v97 = vrot.slane %v96, 4
    %v98 = vadd.f32 %v96, %v97
    %v99 = vrot.slane %v98, 2
    %v100 = vadd.f32 %v98, %v99
    %v101 = vrot.slane %v100, 1
    %v102 = vadd.f32 %v100, %v101
    %v103 = vsel %vm81, %v75, 0.0
    %v104 = vrot.slane %v103, 4
    %v105 = vadd.f32 %v103, %v104
    %v106 = vrot.slane %v105, 2
    %v107 = vadd.f32 %v105, %v106
    %v108 = vrot.slane %v107, 1
    %v109 = vadd.f32 %v107, %v108
    %v110 = vsel %vm81, %v76, 0.0
    %v111 = vrot.slane %v110, 4
    %v112 = vadd.f32 %v110, %v111
    %v113 = vrot.slane %v112, 2
    %v114 = vadd.f32 %v112, %v113
    %v115 = vrot.slane %v114, 1
    %v116 = vadd.f32 %v114, %v115
    %v117 = vsel %vm81, %v77, 0.0
    %v118 = vrot.slane %v117, 4
    %v119 = vadd.f32 %v117, %v118
    %v120 = vrot.slane %v119, 2
    %v121 = vadd.f32 %v119, %v120
    %v122 = vrot.slane %v121, 1
    %v123 = vadd.f32 %v121, %v122
    %v124 = vsel %vm81, %v78, 0.0
    %v125 = vrot.slane %v124, 4
    %v126 = vadd.f32 %v124, %v125
    %v127 = vrot.slane %v126, 2
    %v128 = vadd.f32 %v126, %v127
    %v129 = vrot.slane %v128, 1
    %v130 = vadd.f32 %v128, %v129
    %v131 = vsel %vm81, %v79, 0.0
    %v132 = vrot.slane %v131, 4
    %v133 = vadd.f32 %v131, %v132
    %v134 = vrot.slane %v133, 2
    %v135 = vadd.f32 %v133, %v134
    %v136 = vrot.slane %v135, 1
    %v137 = vadd.f32 %v135, %v136
    %vm146 = vcmask 1041409
    %v147 = vsel %vm146, %v95, %v88
    %vm148 = vcmask 1042434
    %v149 = vsel %vm148, %v102, %v147
    %vm150 = vcmask 1043459
    %v151 = vsel %vm150, %v109, %v149
    %vm152 = vcmask 1044484
    %v153 = vsel %vm152, %v116, %v151
    %vm154 = vcmask 1045509
    %v155 = vsel %vm154, %v123, %v153
    %vm156 = vcmask 1046534
    %v157 = vsel %vm156, %v130, %v155
    %vm158 = vcmask 1047559
    %v159 = vsel %vm158, %v137, %v157
    %v161 = vadd.f32 %v80, %v159
    %162 = vst.msk [vmem:[#allocation2] sm:$0xff] %vm81, %v161
    // Predicated region
    $region38: #{tpu_custom_call.1} parent=1 // pred_check
      %p163 = pneg %p66
    $region39: #{tpu_custom_call.1} parent=1 // pred_check_branch
      %165 = sbr.rel (%p163) target = $region41
    $region40: #{tpu_custom_call.1} parent=1 // pred_region
      %v166 = vld [vmem:[#allocation2] sm:$0xff]
      %v167 = vmul.f32 %v166, 0.125
      %v168 = vsel %vm81, %v167, 0.0
      %169 = vadd.xlane.f32.xlu0 %v168
      %v170 = vpop.xlane.xlu0 %169
      %v171 = vrcp.pop 32.0
      %v172 = vmul.f32 32.0, %v171
      %v173 = vsub.f32 1.0, %v172
      %v174 = vmul.f32 %v171, %v173
      %v175 = vadd.f32 %v171, %v174
      %vm176 = vweird.f32 %v171
      %v177 = vsel %vm176, %v171, %v175
      %v178 = vmul.f32 %v170, %v177
      %v179 = vsub.f32 %v167, %v178
      %v180 = vmul.f32 %v179, %v179
      %v181 = vsel %vm81, %v180, 0.0
      %182 = vadd.xlane.f32.xlu0 %v181
      %v183 = vpop.xlane.xlu0 %182
      %v184 = vmul.f32 %v183, %v177
      %v185 = vadd.f32 %v184, 1e-05
      %v186 = vrsqrt.pop %v185
      %v187 = vmul.f32 %v186, %v185
      %v188 = vmul.f32 %v187, %v186
      %v189 = vmul.f32 0.5, %v188
      %v190 = vsub.f32 1.5, %v189
      %v191 = vmul.f32 %v186, %v190
      %vm192 = vweird.f32 %v185
      %vm193 = vweird.f32 %v186
      %vm194 = vmor %vm192, %vm193
      %v195 = vsel %vm194, %v186, %v191
      %v196 = vmul.f32 %v179, %v195
      %v197 = vld [vmem:[#allocation6] sm:$0x1]
      %v199 = vperm.slane %v197, 0
      %v201 = vmul.f32 %v196, %v199
      %v202 = vld [vmem:[%s2] sm:$0x1]
      %v204 = vperm.slane %v202, 0
      %v206 = vadd.f32 %v201, %v204
      %v207 = vld [vmem:[#allocation8] sm:$0xff]
      %v208 = vld [vmem:[#allocation8 + $0x8] sm:$0xff]
      %v209 = vld [vmem:[#allocation8 + $0x10] sm:$0xff]
      %v210 = vld [vmem:[#allocation8 + $0x18] sm:$0xff]
      %v211 = vld [vmem:[%s4] sm:$0x1]
      %v213 = vperm.slane %v211, 0
      %v216 = vsel %vm81, %v206, 0
      %218 = vmatpush.msra.mxu0 0.0
      %219 = vmatpush.msra.mxu0 0.0
      %220 = vmatpush.msra.mxu0 0.0
      %221 = vmatpush.msra.mxu0 0.0
      %222 = vmatpush.msra.mxu0 0.0
      %223 = vmatpush.msra.mxu0 0.0
      %224 = vmatpush.msra.mxu0 0.0
      %225 = vmatpush.msra.mxu0 0.0
      %226 = vmatpush.msra.mxu0 0.0
      %227 = vmatpush.msra.mxu0 0.0
      %228 = vmatpush.msra.mxu0 0.0
      %229 = vmatpush.msra.mxu0 0.0
      %230 = vmatpush.msra.mxu0 %v210
      %231 = vmatpush.msra.mxu0 %v209
      %232 = vmatpush.msra.mxu0 %v208
      %233 = vmatpush.msra.mxu0 %v207
      %234 = vmatmul.f32.gmra.mxu0 %v216
      %v235 = vpop.f32.mrf.mxu0
      %v236 = vadd.f32 %v213, %v235
      %237 = vdwg.mxu0
      %238 = vst [vmem:[#allocation9] sm:$0xff] %v236
    $region41: #{tpu_custom_call.1} parent=1 // pred_fallthru
      _
    // Predicated region
    $region42: #{tpu_custom_call.1} parent=1 // pred_check
      _
    $region43: #{tpu_custom_call.1} parent=1 // pred_check_branch
      %240 = sbr.rel (0) target = $region45
    $region44: #{tpu_custom_call.1} parent=1 // pred_region
      %242 = vsyncadd [#allocation5], 0
      %s244 = sshll.u32 [#allocation9], 4
      %s245 = int_to_ptr.vmem [resolvable:$true] %s244
      %s246 = sshll.u32 %s5, 4
      %s247 = int_to_ptr.hbm [resolvable:$true] %s246
      %249 = dma.vmem_to_hbm [thread:$0]  %s245, 128, %s247, [#allocation5]
    $region45: #{tpu_custom_call.1} parent=1 // pred_fallthru
      _
    // Predicated region
    $region46: #{tpu_custom_call.1} parent=1 // pred_check
      _
    $region47: #{tpu_custom_call.1} parent=1 // pred_check_branch
      %251 = sbr.rel (0) target = $region49
    $region48: #{tpu_custom_call.1} parent=1 // pred_region
      %253 = dma.done [#allocation5], 128
    $region49: #{tpu_custom_call.1} parent=1 // pred_fallthru
      _
    %254 = vsyncpa [#allocation4], 1
    %255 = vsyncpa [#allocation7], 1
    %256 = vsyncpa [#allocation5], 1

</llo_original>
